<compile_context>
chip_gen: v7x
topology: tpu7x:2x2x1
jax: 0.10.0
libtpu: 0.0.40
codegen_flags: <defaults>
</compile_context>

<pallas_src>
import jax
import jax.numpy as jnp
from jax.experimental import pallas as pl
from jax.experimental.pallas import tpu as pltpu


# ----------------------------------------------------------------------------
# Kernel
# ----------------------------------------------------------------------------
def _make_cell2_kernel(N, H, W, C):
    """Fused SepConv (both ReLU->dw3x3->pw1x1->BN halves) for a fixed shape."""
    NH = N * H
    WC = W * C
    inv_count = 1.0 / float(N * H * W)

    def _per_channel_sum(v):
        # v: (1, WC) per-(w, c) partial sums.  log2(W) roll-add tree over the
        # W lane-groups -> every lane ends up holding the sum over its channel
        # (lane % C), broadcast back onto the lanes.  Lane rolls = XLU slot.
        s = C
        while s < WC:
            v = v + pltpu.roll(v, shift=s, axis=1)
            s *= 2
        return v

    def kernel(x_ref, w_ref, aff_ref, sh_ref, o_ref):
        aff = aff_ref[...]            # (8, WC) f32: rows 0..3 = g1, b1, g2, b2
        s_up = sh_ref[0]              # (NH, NH) bf16: row r <- row r-1 (0 at h==0)
        s_dn = sh_ref[1]              # (NH, NH) bf16: row r <- row r+1 (0 at h==H-1)

        def half(x_in, k):
            # One ReLU -> depthwise3x3 -> pointwise1x1 -> BatchNorm block.
            xb = jnp.maximum(x_in, 0.0).astype(jnp.bfloat16)          # (NH, WC)
            # H-shifted copies (image-boundary rows zeroed) via MXU left-matmuls.
            xu = jnp.dot(s_up, xb,
                         preferred_element_type=jnp.float32).astype(jnp.bfloat16)
            xd = jnp.dot(s_dn, xb,
                         preferred_element_type=jnp.float32).astype(jnp.bfloat16)
            # Fused dw3x3 + pw1x1: three 128x128 lane matmuls, f32 accumulation.
            y = (jnp.dot(xu, w_ref[3 * k + 0], preferred_element_type=jnp.float32)
                 + jnp.dot(xb, w_ref[3 * k + 1], preferred_element_type=jnp.float32)
                 + jnp.dot(xd, w_ref[3 * k + 2], preferred_element_type=jnp.float32))
            # BatchNorm2d, training-mode batch stats (biased var, eps=1e-5),
            # single pass: var = E[y^2] - E[y]^2.
            # TODO(synk): running_mean/running_var EMA buffers are not updated
            # (forward parity with train-mode batch statistics only).
            s1 = _per_channel_sum(jnp.sum(y, axis=0, keepdims=True))
            s2 = _per_channel_sum(jnp.sum(y * y, axis=0, keepdims=True))
            mean = s1 * inv_count
            var = s2 * inv_count - mean * mean
            gamma = aff[2 * k:2 * k + 1, :]
            beta = aff[2 * k + 1:2 * k + 2, :]
            return (y - mean) * (jax.lax.rsqrt(var + 1e-5) * gamma) + beta

        h1 = half(x_ref[...], 0)                       # first SepConv half (f32)
        o_ref[...] = half(h1, 1).astype(o_ref.dtype)   # second half -> output

    return kernel


# ----------------------------------------------------------------------------
# Host-side parameter preparation (hoisted out of the per-call path)
# ----------------------------------------------------------------------------
def _fused_half_matrices(dw, pw, W):
    """Fuse depthwise 3x3 (tap-major (9, C)) and pointwise (C_in, C_out) into
    three (WC, WC) lane-matmul matrices, one per input-row offset dh in
    {-1, 0, +1}.  The conv's W-boundary zero padding falls out of the matrix
    structure (out-of-range w_in lanes have no entry)."""
    C = pw.shape[0]
    WC = W * C
    lane = jnp.arange(WC)
    w_of, c_of = lane // C, lane % C
    dw3 = dw.reshape(3, 3, C)                     # [dh+1, dwo+1, c]
    dwin = w_of[:, None] - w_of[None, :]          # w_in - w_out
    valid = jnp.abs(dwin) <= 1
    ow_idx = jnp.clip(dwin + 1, 0, 2)
    ci = c_of[:, None]                            # input channel  (rows)
    co = c_of[None, :]                            # output channel (cols)
    pcoef = pw[ci, co]                            # (WC, WC)
    mats = []
    for r in range(3):                            # r = dh + 1: 0=up, 1=mid, 2=dn
        dcoef = dw3[r][ow_idx, ci]                # (WC, WC)
        mats.append(jnp.where(valid, dcoef * pcoef, 0.0).astype(jnp.bfloat16))
    return mats


def prepare_cell2_params(params, W):
    """Build, ONCE per parameter set, the two weight slabs the kernel consumes:
       * wmat: (6, WC, WC) bf16 fused dw+pw matmul matrices (both halves)
       * aff:  (8, WC)    f32  per-lane gamma/beta patterns (sublane padded)"""
    mats, affs = [], []
    for blk in params:
        C = blk["gamma"].shape[0]
        WC = W * C
        mats.extend(_fused_half_matrices(blk["dw"], blk["pw"], W))
        lane_c = jnp.arange(WC) % C
        affs.append(blk["gamma"][lane_c])
        affs.append(blk["beta"][lane_c])
    wmat = jnp.stack(mats)                                                  # (6, WC, WC)
    aff = jnp.pad(jnp.stack(affs).astype(jnp.float32), ((0, 4), (0, 0)))    # (8, WC)
    return wmat, aff


def make_cell2_params(C, key):
    """Deterministic SepConv(C, C, 3, 1, 1, affine=True) parameters.
    Note: pw is stored (C_in, C_out) and dw as (9, C) tap-major; importing
    real nn.Conv2d weights ((C_out, C_in, 1, 1) / (C, 1, 3, 3)) needs
    transposes."""
    keys = jax.random.split(key, 4)
    params = []
    for b in range(2):
        params.append(dict(
            dw=0.1 * jax.random.normal(keys[2 * b], (9, C), jnp.float32),
            pw=0.1 * jax.random.normal(keys[2 * b + 1], (C, C), jnp.float32),
            gamma=jnp.ones((C,), jnp.float32),
            beta=jnp.zeros((C,), jnp.float32),
        ))
    return params


# ----------------------------------------------------------------------------
# Forward wrapper
# ----------------------------------------------------------------------------
@jax.jit
def cell2_forward(x_nchw, wmat, aff):
    """Cell2.forward: s = sep_conv_3x3(x).  Input/output are NCHW.
    TODO(synk): in a full model, keep activations in the folded (N*H, W*C)
    layout across cells instead of transposing NCHW<->NHWC around every call.
    """
    N, C, H, W = x_nchw.shape
    WC = W * C
    NH = N * H
    assert WC % 128 == 0, "lane-dense layout requires W*C to be a multiple of 128"
    assert W & (W - 1) == 0, "per-channel roll-add tree assumes power-of-two W"

    # NCHW -> NHWC, fold (W, C) onto lanes, (N, H) onto sublanes; bf16
    # activations halve the input DMA (matmul operands are bf16 anyway).
    x_fold = jnp.transpose(x_nchw, (0, 2, 3, 1)).reshape(NH, WC).astype(jnp.bfloat16)

    # Row-shift matrices for the depthwise conv's H offsets (zero rows at the
    # image boundaries supply the H zero padding).  Shape-only computation,
    # XLA constant-folds it.
    i = jnp.arange(NH)[:, None]
    j = jnp.arange(NH)[None, :]
    s_up = ((i == j + 1) & (i % H != 0)).astype(jnp.bfloat16)
    s_dn = ((i + 1 == j) & (i % H != H - 1)).astype(jnp.bfloat16)
    shifts = jnp.stack([s_up, s_dn])                         # (2, NH, NH)

    vmem = pl.BlockSpec(memory_space=pltpu.MemorySpace.VMEM)
    out = pl.pallas_call(
        _make_cell2_kernel(N, H, W, C),
        out_shape=jax.ShapeDtypeStruct((NH, WC), jnp.float32),
        in_specs=[vmem, vmem, vmem, vmem],
        out_specs=vmem,
        # Single ungridded call: whole problem is a few vregs of activations.
        # TODO(synk): add a "parallel" grid over N / H blocks (v7x megacore)
        # when scaling beyond this toy shape; mind v7x's 64 MiB VMEM.
    )(x_fold, wmat, aff, shifts)

    return jnp.transpose(out.reshape(N, H, W, C), (0, 3, 1, 2))  # back to NCHW


# ----------------------------------------------------------------------------
# Pure-JAX reference (validation only)
# ----------------------------------------------------------------------------
def cell2_reference(x_nchw, params):
    """f32 reference of the same SepConv math (module semantics)."""
    h = jnp.transpose(x_nchw, (0, 2, 3, 1)).astype(jnp.float32)
    N, H, W, C = h.shape
    for blk in params:
        xr = jnp.maximum(h, 0.0)
        xp = jnp.pad(xr, ((0, 0), (1, 1), (1, 1), (0, 0)))
        acc = jnp.zeros((N, H, W, C), jnp.float32)
        for oh in range(3):
            for ow in range(3):
                acc = acc + xp[:, oh:oh + H, ow:ow + W, :] * blk["dw"][3 * oh + ow]
        y = jnp.einsum("nhwc,cd->nhwd", acc, blk["pw"],
                       precision=jax.lax.Precision.HIGHEST)
        mean = jnp.mean(y, axis=(0, 1, 2), keepdims=True)
        var = jnp.mean((y - mean) ** 2, axis=(0, 1, 2), keepdims=True)
        h = (y - mean) * jax.lax.rsqrt(var + 1e-5) * blk["gamma"] + blk["beta"]
    return jnp.transpose(h, (0, 3, 1, 2))


if __name__ == "__main__":
    N, C, H, W = 2, 8, 16, 16      # W*C = 128 lane-dense; N*H = 32 sublane rows
    key = jax.random.PRNGKey(0)
    kx, kp = jax.random.split(key)
    x = jax.random.normal(kx, (N, C, H, W), jnp.float32)
    params = make_cell2_params(C, kp)

    # Weight slabs are prepared once per parameter set (hoisted out of the
    # per-call path), then reused across forward calls.
    wmat, aff = prepare_cell2_params(params, W)

    out = cell2_forward(x, wmat, aff)
    jax.block_until_ready(out)
    assert out.shape == (N, C, H, W), out.shape

    ref = cell2_reference(x, params)
    err = float(jnp.max(jnp.abs(out - ref)))
    # bf16 MXU operands (f32 accumulation) vs an f32 reference -> relaxed
    # tolerance; the math is otherwise identical.
    assert jnp.allclose(out, ref, atol=5e-2, rtol=5e-2), err
    print("KERNEL_OK")
</pallas_src>

<mosaic_0001>
module attributes {stable_mosaic.version = 11 : i64} {
  func.func @kernel(%arg0: memref<32x128xbf16, #tpu.memory_space<vmem>>, %arg1: memref<6x128x128xbf16, #tpu.memory_space<vmem>>, %arg2: memref<8x128xf32, #tpu.memory_space<vmem>>, %arg3: memref<2x32x32xbf16, #tpu.memory_space<vmem>>, %arg4: memref<32x128xf32, #tpu.memory_space<vmem>>) attributes {dimension_semantics = [], scalar_prefetch = 0 : i64, scratch_operands = 0 : i64, tpu.core_type = #tpu.core_type<tc>} {
    %c0 = arith.constant 0 : index
    %c0_0 = arith.constant 0 : index
    %0 = vector.load %arg2[%c0, %c0_0] : memref<8x128xf32, #tpu.memory_space<vmem>>, vector<8x128xf32>
    %c0_1 = arith.constant 0 : index
    %c0_2 = arith.constant 0 : index
    %c0_3 = arith.constant 0 : index
    %1 = vector.load %arg3[%c0_1, %c0_2, %c0_3] : memref<2x32x32xbf16, #tpu.memory_space<vmem>>, vector<1x32x32xbf16>
    %2 = vector.shape_cast %1 : vector<1x32x32xbf16> to vector<32x32xbf16>
    %c1 = arith.constant 1 : index
    %c0_4 = arith.constant 0 : index
    %c0_5 = arith.constant 0 : index
    %3 = vector.load %arg3[%c1, %c0_4, %c0_5] : memref<2x32x32xbf16, #tpu.memory_space<vmem>>, vector<1x32x32xbf16>
    %4 = vector.shape_cast %3 : vector<1x32x32xbf16> to vector<32x32xbf16>
    %c0_6 = arith.constant 0 : index
    %c0_7 = arith.constant 0 : index
    %5 = vector.load %arg0[%c0_6, %c0_7] : memref<32x128xbf16, #tpu.memory_space<vmem>>, vector<32x128xbf16>
    %cst = arith.constant 0.000000e+00 : bf16
    %6 = vector.broadcast %cst : bf16 to vector<32x128xbf16>
    %7 = arith.maximumf %5, %6 : vector<32x128xbf16>
    %cst_8 = arith.constant dense<0.000000e+00> : vector<32x128xf32>
    %8 = tpu.matmul %2, %7, %cst_8 {dimension_numbers = #tpu.dot_dimension_numbers<[1], [0], [0], [1], [0, 0, 1, 1], [], []>} : vector<32x32xbf16>, vector<32x128xbf16>, vector<32x128xf32> -> vector<32x128xf32>
    %9 = arith.truncf %8 : vector<32x128xf32> to vector<32x128xbf16>
    %cst_9 = arith.constant dense<0.000000e+00> : vector<32x128xf32>
    %10 = tpu.matmul %4, %7, %cst_9 {dimension_numbers = #tpu.dot_dimension_numbers<[1], [0], [0], [1], [0, 0, 1, 1], [], []>} : vector<32x32xbf16>, vector<32x128xbf16>, vector<32x128xf32> -> vector<32x128xf32>
    %11 = arith.truncf %10 : vector<32x128xf32> to vector<32x128xbf16>
    %c0_10 = arith.constant 0 : index
    %c0_11 = arith.constant 0 : index
    %c0_12 = arith.constant 0 : index
    %12 = vector.load %arg1[%c0_10, %c0_11, %c0_12] : memref<6x128x128xbf16, #tpu.memory_space<vmem>>, vector<1x128x128xbf16>
    %13 = vector.shape_cast %12 : vector<1x128x128xbf16> to vector<128x128xbf16>
    %cst_13 = arith.constant dense<0.000000e+00> : vector<32x128xf32>
    %14 = tpu.matmul %9, %13, %cst_13 {dimension_numbers = #tpu.dot_dimension_numbers<[1], [0], [0], [1], [0, 0, 1, 1], [], []>} : vector<32x128xbf16>, vector<128x128xbf16>, vector<32x128xf32> -> vector<32x128xf32>
    %c1_14 = arith.constant 1 : index
    %c0_15 = arith.constant 0 : index
    %c0_16 = arith.constant 0 : index
    %15 = vector.load %arg1[%c1_14, %c0_15, %c0_16] : memref<6x128x128xbf16, #tpu.memory_space<vmem>>, vector<1x128x128xbf16>
    %16 = vector.shape_cast %15 : vector<1x128x128xbf16> to vector<128x128xbf16>
    %cst_17 = arith.constant dense<0.000000e+00> : vector<32x128xf32>
    %17 = tpu.matmul %7, %16, %cst_17 {dimension_numbers = #tpu.dot_dimension_numbers<[1], [0], [0], [1], [0, 0, 1, 1], [], []>} : vector<32x128xbf16>, vector<128x128xbf16>, vector<32x128xf32> -> vector<32x128xf32>
    %18 = arith.addf %14, %17 : vector<32x128xf32>
    %c2 = arith.constant 2 : index
    %c0_18 = arith.constant 0 : index
    %c0_19 = arith.constant 0 : index
    %19 = vector.load %arg1[%c2, %c0_18, %c0_19] : memref<6x128x128xbf16, #tpu.memory_space<vmem>>, vector<1x128x128xbf16>
    %20 = vector.shape_cast %19 : vector<1x128x128xbf16> to vector<128x128xbf16>
    %cst_20 = arith.constant dense<0.000000e+00> : vector<32x128xf32>
    %21 = tpu.matmul %11, %20, %cst_20 {dimension_numbers = #tpu.dot_dimension_numbers<[1], [0], [0], [1], [0, 0, 1, 1], [], []>} : vector<32x128xbf16>, vector<128x128xbf16>, vector<32x128xf32> -> vector<32x128xf32>
    %22 = arith.addf %18, %21 : vector<32x128xf32>
    %cst_21 = arith.constant dense<0.000000e+00> : vector<128xf32>
    %23 = vector.multi_reduction <add>, %22, %cst_21 [0] : vector<32x128xf32> to vector<128xf32>
    %24 = vector.shape_cast %23 : vector<128xf32> to vector<1x128xf32>
    %c8_i32 = arith.constant 8 : i32
    %25 = tpu.dynamic_rotate %24 by %c8_i32 dim 1 : vector<1x128xf32>, i32 -> vector<1x128xf32>
    %26 = arith.addf %24, %25 : vector<1x128xf32>
    %c16_i32 = arith.constant 16 : i32
    %27 = tpu.dynamic_rotate %26 by %c16_i32 dim 1 : vector<1x128xf32>, i32 -> vector<1x128xf32>
    %28 = arith.addf %26, %27 : vector<1x128xf32>
    %c32_i32 = arith.constant 32 : i32
    %29 = tpu.dynamic_rotate %28 by %c32_i32 dim 1 : vector<1x128xf32>, i32 -> vector<1x128xf32>
    %30 = arith.addf %28, %29 : vector<1x128xf32>
    %c64_i32 = arith.constant 64 : i32
    %31 = tpu.dynamic_rotate %30 by %c64_i32 dim 1 : vector<1x128xf32>, i32 -> vector<1x128xf32>
    %32 = arith.addf %30, %31 : vector<1x128xf32>
    %33 = arith.mulf %22, %22 : vector<32x128xf32>
    %cst_22 = arith.constant dense<0.000000e+00> : vector<128xf32>
    %34 = vector.multi_reduction <add>, %33, %cst_22 [0] : vector<32x128xf32> to vector<128xf32>
    %35 = vector.shape_cast %34 : vector<128xf32> to vector<1x128xf32>
    %c8_i32_23 = arith.constant 8 : i32
    %36 = tpu.dynamic_rotate %35 by %c8_i32_23 dim 1 : vector<1x128xf32>, i32 -> vector<1x128xf32>
    %37 = arith.addf %35, %36 : vector<1x128xf32>
    %c16_i32_24 = arith.constant 16 : i32
    %38 = tpu.dynamic_rotate %37 by %c16_i32_24 dim 1 : vector<1x128xf32>, i32 -> vector<1x128xf32>
    %39 = arith.addf %37, %38 : vector<1x128xf32>
    %c32_i32_25 = arith.constant 32 : i32
    %40 = tpu.dynamic_rotate %39 by %c32_i32_25 dim 1 : vector<1x128xf32>, i32 -> vector<1x128xf32>
    %41 = arith.addf %39, %40 : vector<1x128xf32>
    %c64_i32_26 = arith.constant 64 : i32
    %42 = tpu.dynamic_rotate %41 by %c64_i32_26 dim 1 : vector<1x128xf32>, i32 -> vector<1x128xf32>
    %43 = arith.addf %41, %42 : vector<1x128xf32>
    %cst_27 = arith.constant 0.001953125 : f32
    %44 = vector.broadcast %cst_27 : f32 to vector<1x128xf32>
    %45 = arith.mulf %32, %44 : vector<1x128xf32>
    %cst_28 = arith.constant 0.001953125 : f32
    %46 = vector.broadcast %cst_28 : f32 to vector<1x128xf32>
    %47 = arith.mulf %43, %46 : vector<1x128xf32>
    %48 = arith.mulf %45, %45 : vector<1x128xf32>
    %49 = arith.subf %47, %48 : vector<1x128xf32>
    %50 = vector.extract_strided_slice %0 {offsets = [0, 0], sizes = [1, 128], strides = [1, 1]} : vector<8x128xf32> to vector<1x128xf32>
    %51 = vector.extract_strided_slice %0 {offsets = [1, 0], sizes = [1, 128], strides = [1, 1]} : vector<8x128xf32> to vector<1x128xf32>
    %52 = vector.broadcast %45 : vector<1x128xf32> to vector<32x128xf32>
    %53 = arith.subf %22, %52 : vector<32x128xf32>
    %cst_29 = arith.constant 9.99999974E-6 : f32
    %54 = vector.broadcast %cst_29 : f32 to vector<1x128xf32>
    %55 = arith.addf %49, %54 : vector<1x128xf32>
    %56 = math.rsqrt %55 : vector<1x128xf32>
    %57 = arith.mulf %56, %50 : vector<1x128xf32>
    %58 = vector.broadcast %57 : vector<1x128xf32> to vector<32x128xf32>
    %59 = arith.mulf %53, %58 : vector<32x128xf32>
    %60 = vector.broadcast %51 : vector<1x128xf32> to vector<32x128xf32>
    %61 = arith.addf %59, %60 : vector<32x128xf32>
    %cst_30 = arith.constant 0.000000e+00 : f32
    %62 = vector.broadcast %cst_30 : f32 to vector<32x128xf32>
    %63 = arith.maximumf %61, %62 : vector<32x128xf32>
    %64 = arith.truncf %63 : vector<32x128xf32> to vector<32x128xbf16>
    %cst_31 = arith.constant dense<0.000000e+00> : vector<32x128xf32>
    %65 = tpu.matmul %2, %64, %cst_31 {dimension_numbers = #tpu.dot_dimension_numbers<[1], [0], [0], [1], [0, 0, 1, 1], [], []>} : vector<32x32xbf16>, vector<32x128xbf16>, vector<32x128xf32> -> vector<32x128xf32>
    %66 = arith.truncf %65 : vector<32x128xf32> to vector<32x128xbf16>
    %cst_32 = arith.constant dense<0.000000e+00> : vector<32x128xf32>
    %67 = tpu.matmul %4, %64, %cst_32 {dimension_numbers = #tpu.dot_dimension_numbers<[1], [0], [0], [1], [0, 0, 1, 1], [], []>} : vector<32x32xbf16>, vector<32x128xbf16>, vector<32x128xf32> -> vector<32x128xf32>
    %68 = arith.truncf %67 : vector<32x128xf32> to vector<32x128xbf16>
    %c3 = arith.constant 3 : index
    %c0_33 = arith.constant 0 : index
    %c0_34 = arith.constant 0 : index
    %69 = vector.load %arg1[%c3, %c0_33, %c0_34] : memref<6x128x128xbf16, #tpu.memory_space<vmem>>, vector<1x128x128xbf16>
    %70 = vector.shape_cast %69 : vector<1x128x128xbf16> to vector<128x128xbf16>
    %cst_35 = arith.constant dense<0.000000e+00> : vector<32x128xf32>
    %71 = tpu.matmul %66, %70, %cst_35 {dimension_numbers = #tpu.dot_dimension_numbers<[1], [0], [0], [1], [0, 0, 1, 1], [], []>} : vector<32x128xbf16>, vector<128x128xbf16>, vector<32x128xf32> -> vector<32x128xf32>
    %c4 = arith.constant 4 : index
    %c0_36 = arith.constant 0 : index
    %c0_37 = arith.constant 0 : index
    %72 = vector.load %arg1[%c4, %c0_36, %c0_37] : memref<6x128x128xbf16, #tpu.memory_space<vmem>>, vector<1x128x128xbf16>
    %73 = vector.shape_cast %72 : vector<1x128x128xbf16> to vector<128x128xbf16>
    %cst_38 = arith.constant dense<0.000000e+00> : vector<32x128xf32>
    %74 = tpu.matmul %64, %73, %cst_38 {dimension_numbers = #tpu.dot_dimension_numbers<[1], [0], [0], [1], [0, 0, 1, 1], [], []>} : vector<32x128xbf16>, vector<128x128xbf16>, vector<32x128xf32> -> vector<32x128xf32>
    %75 = arith.addf %71, %74 : vector<32x128xf32>
    %c5 = arith.constant 5 : index
    %c0_39 = arith.constant 0 : index
    %c0_40 = arith.constant 0 : index
    %76 = vector.load %arg1[%c5, %c0_39, %c0_40] : memref<6x128x128xbf16, #tpu.memory_space<vmem>>, vector<1x128x128xbf16>
    %77 = vector.shape_cast %76 : vector<1x128x128xbf16> to vector<128x128xbf16>
    %cst_41 = arith.constant dense<0.000000e+00> : vector<32x128xf32>
    %78 = tpu.matmul %68, %77, %cst_41 {dimension_numbers = #tpu.dot_dimension_numbers<[1], [0], [0], [1], [0, 0, 1, 1], [], []>} : vector<32x128xbf16>, vector<128x128xbf16>, vector<32x128xf32> -> vector<32x128xf32>
    %79 = arith.addf %75, %78 : vector<32x128xf32>
    %cst_42 = arith.constant dense<0.000000e+00> : vector<128xf32>
    %80 = vector.multi_reduction <add>, %79, %cst_42 [0] : vector<32x128xf32> to vector<128xf32>
    %81 = vector.shape_cast %80 : vector<128xf32> to vector<1x128xf32>
    %c8_i32_43 = arith.constant 8 : i32
    %82 = tpu.dynamic_rotate %81 by %c8_i32_43 dim 1 : vector<1x128xf32>, i32 -> vector<1x128xf32>
    %83 = arith.addf %81, %82 : vector<1x128xf32>
    %c16_i32_44 = arith.constant 16 : i32
    %84 = tpu.dynamic_rotate %83 by %c16_i32_44 dim 1 : vector<1x128xf32>, i32 -> vector<1x128xf32>
    %85 = arith.addf %83, %84 : vector<1x128xf32>
    %c32_i32_45 = arith.constant 32 : i32
    %86 = tpu.dynamic_rotate %85 by %c32_i32_45 dim 1 : vector<1x128xf32>, i32 -> vector<1x128xf32>
    %87 = arith.addf %85, %86 : vector<1x128xf32>
    %c64_i32_46 = arith.constant 64 : i32
    %88 = tpu.dynamic_rotate %87 by %c64_i32_46 dim 1 : vector<1x128xf32>, i32 -> vector<1x128xf32>
    %89 = arith.addf %87, %88 : vector<1x128xf32>
    %90 = arith.mulf %79, %79 : vector<32x128xf32>
    %cst_47 = arith.constant dense<0.000000e+00> : vector<128xf32>
    %91 = vector.multi_reduction <add>, %90, %cst_47 [0] : vector<32x128xf32> to vector<128xf32>
    %92 = vector.shape_cast %91 : vector<128xf32> to vector<1x128xf32>
    %c8_i32_48 = arith.constant 8 : i32
    %93 = tpu.dynamic_rotate %92 by %c8_i32_48 dim 1 : vector<1x128xf32>, i32 -> vector<1x128xf32>
    %94 = arith.addf %92, %93 : vector<1x128xf32>
    %c16_i32_49 = arith.constant 16 : i32
    %95 = tpu.dynamic_rotate %94 by %c16_i32_49 dim 1 : vector<1x128xf32>, i32 -> vector<1x128xf32>
    %96 = arith.addf %94, %95 : vector<1x128xf32>
    %c32_i32_50 = arith.constant 32 : i32
    %97 = tpu.dynamic_rotate %96 by %c32_i32_50 dim 1 : vector<1x128xf32>, i32 -> vector<1x128xf32>
    %98 = arith.addf %96, %97 : vector<1x128xf32>
    %c64_i32_51 = arith.constant 64 : i32
    %99 = tpu.dynamic_rotate %98 by %c64_i32_51 dim 1 : vector<1x128xf32>, i32 -> vector<1x128xf32>
    %100 = arith.addf %98, %99 : vector<1x128xf32>
    %cst_52 = arith.constant 0.001953125 : f32
    %101 = vector.broadcast %cst_52 : f32 to vector<1x128xf32>
    %102 = arith.mulf %89, %101 : vector<1x128xf32>
    %cst_53 = arith.constant 0.001953125 : f32
    %103 = vector.broadcast %cst_53 : f32 to vector<1x128xf32>
    %104 = arith.mulf %100, %103 : vector<1x128xf32>
    %105 = arith.mulf %102, %102 : vector<1x128xf32>
    %106 = arith.subf %104, %105 : vector<1x128xf32>
    %107 = vector.extract_strided_slice %0 {offsets = [2, 0], sizes = [1, 128], strides = [1, 1]} : vector<8x128xf32> to vector<1x128xf32>
    %108 = vector.extract_strided_slice %0 {offsets = [3, 0], sizes = [1, 128], strides = [1, 1]} : vector<8x128xf32> to vector<1x128xf32>
    %109 = vector.broadcast %102 : vector<1x128xf32> to vector<32x128xf32>
    %110 = arith.subf %79, %109 : vector<32x128xf32>
    %cst_54 = arith.constant 9.99999974E-6 : f32
    %111 = vector.broadcast %cst_54 : f32 to vector<1x128xf32>
    %112 = arith.addf %106, %111 : vector<1x128xf32>
    %113 = math.rsqrt %112 : vector<1x128xf32>
    %114 = arith.mulf %113, %107 : vector<1x128xf32>
    %115 = vector.broadcast %114 : vector<1x128xf32> to vector<32x128xf32>
    %116 = arith.mulf %110, %115 : vector<32x128xf32>
    %117 = vector.broadcast %108 : vector<1x128xf32> to vector<32x128xf32>
    %118 = arith.addf %116, %117 : vector<32x128xf32>
    %c0_55 = arith.constant 0 : index
    %c0_56 = arith.constant 0 : index
    %119 = vector.load %arg4[%c0_55, %c0_56] : memref<32x128xf32, #tpu.memory_space<vmem>>, vector<32x128xf32>
    tpu.vector_store %arg4[%c0_55, %c0_56], %118 {strides = array<i32>} : memref<32x128xf32, #tpu.memory_space<vmem>>, vector<32x128xf32>,
    return
  }
}

</mosaic_0001>

<llo_original>
// kernel: cell2_forward.1
$region0: #{cell2_forward.1}
  #allocation0 [shape = 'u32[]', space=smem, size = 0x4, offset = 0x4, fixed_abs, tag = 'smem constant byte address 0x4 - core index']
  #allocation1 [shape = 'u32[144,128]{1,0:T(1,128)}', space=vmem, size = 0x12000, scoped, tag = 'internal scratch']
  %s0 = inlined_call_operand.vmem [shape: bf16[32,128], index: 0, kind: input, shape index: {}]
  %s1 = inlined_call_operand.vmem [shape: bf16[6,128,128], index: 1, kind: input, shape index: {}]
  %s2 = inlined_call_operand.vmem [shape: f32[8,128], index: 2, kind: input, shape index: {}]
  %s3 = inlined_call_operand.vmem [shape: bf16[2,32,32], index: 3, kind: input, shape index: {}]
  %s4 = inlined_call_operand.vmem [shape: f32[32,128], index: 4, kind: output, shape index: {}]
  %s5 = sld [smem:[#allocation0]]
  $region26: #{cell2_forward.1} parent=0
    _
  %s7 = ssub.s32 1, %s5
  %s8 = scalar_select 0, %s7, %s5
  // Predicated region
  $region2: #{cell2_forward.1} parent=0 // pred_check
    _
  $region3: #{cell2_forward.1} parent=0 // pred_check_branch
    %10 = sbr.rel (0) target = $region5
  $region4: #{cell2_forward.1} parent=0 // pred_region
    _
  $region5: #{cell2_forward.1} parent=0 // pred_fallthru
    _
  // Predicated region
  $region6: #{cell2_forward.1} parent=0 // pred_check
    _
  $region7: #{cell2_forward.1} parent=0 // pred_check_branch
    %12 = sbr.rel (0) target = $region9
  $region8: #{cell2_forward.1} parent=0 // pred_region
    _
  $region9: #{cell2_forward.1} parent=0 // pred_fallthru
    _
  // Predicated region
  $region10: #{cell2_forward.1} parent=0 // pred_check
    _
  $region11: #{cell2_forward.1} parent=0 // pred_check_branch
    %14 = sbr.rel (0) target = $region13
  $region12: #{cell2_forward.1} parent=0 // pred_region
    _
  $region13: #{cell2_forward.1} parent=0 // pred_fallthru
    _
  // Predicated region
  $region14: #{cell2_forward.1} parent=0 // pred_check
    _
  $region15: #{cell2_forward.1} parent=0 // pred_check_branch
    %16 = sbr.rel (0) target = $region17
  $region16: #{cell2_forward.1} parent=0 // pred_region
    _
  $region17: #{cell2_forward.1} parent=0 // pred_fallthru
    _
  %v18 = vld [vmem:[%s2] sm:$0xff]
  %v19 = vld [vmem:[%s3] sm:$0xf]
  %v20 = vld [vmem:[%s3 + $0x4] sm:$0xf]
  %v21 = vld [vmem:[%s3 + $0x8] sm:$0xf]
  %v22 = vld [vmem:[%s3 + $0xc] sm:$0xf]
  %s23 = scalar_lea.vmem %s3, 16
  %v24 = vld [vmem:[%s23] sm:$0xf]
  %v25 = vld [vmem:[%s23 + $0x4] sm:$0xf]
  %v26 = vld [vmem:[%s23 + $0x8] sm:$0xf]
  %v27 = vld [vmem:[%s23 + $0xc] sm:$0xf]
  %v28 = vld [vmem:[%s0] sm:$0xf]
  %v29 = vld [vmem:[%s0 + $0x4] sm:$0xf]
  %v30 = vld [vmem:[%s0 + $0x8] sm:$0xf]
  %v31 = vld [vmem:[%s0 + $0xc] sm:$0xf]
  %v32 = vmax.bf16 %v28, 0
  %v33 = vmax.bf16 %v29, 0
  %v34 = vmax.bf16 %v30, 0
  %v35 = vmax.bf16 %v31, 0
  %v40 = vunpack.c.l.b16 %v19
  %v41 = vunpack.c.l.b16 %v20
  %v42 = vunpack.c.l.b16 %v21
  %v43 = vunpack.c.l.b16 %v22
  %v44 = vpack.c.b16 %v41, %v40
  %v45 = vpack.c.b16 %v43, %v42
  %v50 = vunpack.c.l.b16 %v32
  %v51 = vunpack.c.l.b16 %v33
  %v52 = vunpack.c.l.b16 %v34
  %v53 = vunpack.c.l.b16 %v35
  %v54 = vpack.c.b16 %v51, %v50
  %v55 = vpack.c.b16 %v53, %v52
  %vm58 = vcmask 261120
  %v60 = vsel %vm58, %v44, 0
  %v63 = vsel %vm58, %v45, 0
  %65 = vmatprep.subr.bf16.mxu0 0
  %66 = vmatpush1.bf16.msra.mxu0 %v54
  %67 = vmatprep.subr.bf16.mxu0 0
  %68 = vmatpush1.bf16.msra.mxu0 %v55
  %69 = vmatprep.subr.bf16.mxu0 0
  %70 = vmatpush1.bf16.msra.mxu0 0
  %71 = vmatprep.subr.bf16.mxu0 0
  %72 = vmatpush1.bf16.msra.mxu0 0
  %73 = vmatprep.subr.bf16.mxu0 0
  %74 = vmatpush1.bf16.msra.mxu0 0
  %75 = vmatprep.subr.bf16.mxu0 0
  %76 = vmatpush1.bf16.msra.mxu0 0
  %77 = vmatprep.subr.bf16.mxu0 0
  %78 = vmatpush1.bf16.msra.mxu0 0
  %79 = vmatprep.subr.bf16.mxu0 0
  %80 = vmatpush1.bf16.msra.mxu0 0
  %81 = vmatprep.subr.bf16.mxu0 0
  %82 = vmatpush1.bf16.msra.mxu0 0
  %83 = vmatprep.subr.bf16.mxu0 0
  %84 = vmatpush1.bf16.msra.mxu0 0
  %85 = vmatprep.subr.bf16.mxu0 0
  %86 = vmatpush1.bf16.msra.mxu0 0
  %87 = vmatprep.subr.bf16.mxu0 0
  %88 = vmatpush1.bf16.msra.mxu0 0
  %89 = vmatprep.subr.bf16.mxu0 0
  %90 = vmatpush1.bf16.msra.mxu0 0
  %91 = vmatprep.subr.bf16.mxu0 0
  %92 = vmatpush1.bf16.msra.mxu0 0
  %93 = vmatprep.subr.bf16.mxu0 0
  %94 = vmatpush1.bf16.msra.mxu0 0
  %95 = vmatprep.subr.bf16.mxu0 0
  %96 = vmatpush1.bf16.msra.mxu0 0
  %97 = vmatprep.mubr.bf16.mxu0 0
  %98 = vmatmul.mubr.bf16.gmra.mrb[0].mxu0 %v60
  %v99 = vpop.f32.mrb[0].mxu0
  %v100 = vadd.f32 0.0, %v99
  %v101 = vpop.f32.mrb[0].mxu0
  %v102 = vpop.f32.mrb[0].mxu0
  %v103 = vadd.f32 0.0, %v102
  %v104 = vpop.f32.mrb[0].mxu0
  %105 = vmatprep.mubr.bf16.mxu0 0
  %106 = vmatmul.mubr.bf16.gmra.mrb[0].mxu0 %v63
  %v107 = vpop.f32.mrb[0].mxu0
  %v108 = vadd.f32 0.0, %v107
  %v109 = vpop.f32.mrb[0].mxu0
  %v110 = vpop.f32.mrb[0].mxu0
  %v111 = vadd.f32 0.0, %v110
  %v112 = vpop.f32.mrb[0].mxu0
  %113 = vdwg.mxu0
  %v114 = vpack.c.bf16 %v103, %v100
  %v115 = vpack.c.bf16 %v111, %v108
  %v120 = vunpack.c.l.b16 %v24
  %v121 = vunpack.c.l.b16 %v25
  %v122 = vunpack.c.l.b16 %v26
  %v123 = vunpack.c.l.b16 %v27
  %v124 = vpack.c.b16 %v121, %v120
  %v125 = vpack.c.b16 %v123, %v122
  %v127 = vsel %vm58, %v124, 0
  %v130 = vsel %vm58, %v125, 0
  %132 = vmatprep.subr.bf16.mxu0 0
  %133 = vmatpush1.bf16.msra.mxu0 %v54
  %134 = vmatprep.subr.bf16.mxu0 0
  %135 = vmatpush1.bf16.msra.mxu0 %v55
  %136 = vmatprep.subr.bf16.mxu0 0
  %137 = vmatpush1.bf16.msra.mxu0 0
  %138 = vmatprep.subr.bf16.mxu0 0
  %139 = vmatpush1.bf16.msra.mxu0 0
  %140 = vmatprep.subr.bf16.mxu0 0
  %141 = vmatpush1.bf16.msra.mxu0 0
  %142 = vmatprep.subr.bf16.mxu0 0
  %143 = vmatpush1.bf16.msra.mxu0 0
  %144 = vmatprep.subr.bf16.mxu0 0
  %145 = vmatpush1.bf16.msra.mxu0 0
  %146 = vmatprep.subr.bf16.mxu0 0
  %147 = vmatpush1.bf16.msra.mxu0 0
  %148 = vmatprep.subr.bf16.mxu0 0
  %149 = vmatpush1.bf16.msra.mxu0 0
  %150 = vmatprep.subr.bf16.mxu0 0
  %151 = vmatpush1.bf16.msra.mxu0 0
  %152 = vmatprep.subr.bf16.mxu0 0
  %153 = vmatpush1.bf16.msra.mxu0 0
  %154 = vmatprep.subr.bf16.mxu0 0
  %155 = vmatpush1.bf16.msra.mxu0 0
  %156 = vmatprep.subr.bf16.mxu0 0
  %157 = vmatpush1.bf16.msra.mxu0 0
  %158 = vmatprep.subr.bf16.mxu0 0
  %159 = vmatpush1.bf16.msra.mxu0 0
  %160 = vmatprep.subr.bf16.mxu0 0
  %161 = vmatpush1.bf16.msra.mxu0 0
  %162 = vmatprep.subr.bf16.mxu0 0
  %163 = vmatpush1.bf16.msra.mxu0 0
  %164 = vmatprep.mubr.bf16.mxu0 0
  %165 = vmatmul.mubr.bf16.gmra.mrb[0].mxu0 %v127
  %v166 = vpop.f32.mrb[0].mxu0
  %v167 = vadd.f32 0.0, %v166
  %v168 = vpop.f32.mrb[0].mxu0
  %v169 = vpop.f32.mrb[0].mxu0
  %v170 = vadd.f32 0.0, %v169
  %v171 = vpop.f32.mrb[0].mxu0
  %172 = vmatprep.mubr.bf16.mxu0 0
  %173 = vmatmul.mubr.bf16.gmra.mrb[0].mxu0 %v130
  %v174 = vpop.f32.mrb[0].mxu0
  %v175 = vadd.f32 0.0, %v174
  %v176 = vpop.f32.mrb[0].mxu0
  %v177 = vpop.f32.mrb[0].mxu0
  %v178 = vadd.f32 0.0, %v177
  %v179 = vpop.f32.mrb[0].mxu0
  %180 = vdwg.mxu0
  %v181 = vpack.c.bf16 %v170, %v167
  %v182 = vpack.c.bf16 %v178, %v175
  %v183 = vld [vmem:[%s1] sm:$0xf]
  %v184 = vld [vmem:[%s1 + $0x4] sm:$0xf]
  %v185 = vld [vmem:[%s1 + $0x8] sm:$0xf]
  %v186 = vld [vmem:[%s1 + $0xc] sm:$0xf]
  %v187 = vld [vmem:[%s1 + $0x10] sm:$0xf]
  %v188 = vld [vmem:[%s1 + $0x14] sm:$0xf]
  %v189 = vld [vmem:[%s1 + $0x18] sm:$0xf]
  %v190 = vld [vmem:[%s1 + $0x1c] sm:$0xf]
  %v191 = vld [vmem:[%s1 + $0x20] sm:$0xf]
  %v192 = vld [vmem:[%s1 + $0x24] sm:$0xf]
  %v193 = vld [vmem:[%s1 + $0x28] sm:$0xf]
  %v194 = vld [vmem:[%s1 + $0x2c] sm:$0xf]
  %v195 = vld [vmem:[%s1 + $0x30] sm:$0xf]
  %v196 = vld [vmem:[%s1 + $0x34] sm:$0xf]
  %v197 = vld [vmem:[%s1 + $0x38] sm:$0xf]
  %v198 = vld [vmem:[%s1 + $0x3c] sm:$0xf]
  %s199 = scalar_lea.vmem %s1, 64
  %v200 = vld [vmem:[%s199] sm:$0xf]
  %v201 = vld [vmem:[%s199 + $0x4] sm:$0xf]
  %v202 = vld [vmem:[%s199 + $0x8] sm:$0xf]
  %v203 = vld [vmem:[%s199 + $0xc] sm:$0xf]
  %v204 = vld [vmem:[%s199 + $0x10] sm:$0xf]
  %v205 = vld [vmem:[%s199 + $0x14] sm:$0xf]
  %v206 = vld [vmem:[%s199 + $0x18] sm:$0xf]
  %v207 = vld [vmem:[%s199 + $0x1c] sm:$0xf]
  %v208 = vld [vmem:[%s199 + $0x20] sm:$0xf]
  %v209 = vld [vmem:[%s199 + $0x24] sm:$0xf]
  %v210 = vld [vmem:[%s199 + $0x28] sm:$0xf]
  %v211 = vld [vmem:[%s199 + $0x2c] sm:$0xf]
  %v212 = vld [vmem:[%s199 + $0x30] sm:$0xf]
  %v213 = vld [vmem:[%s199 + $0x34] sm:$0xf]
  %v214 = vld [vmem:[%s199 + $0x38] sm:$0xf]
  %v215 = vld [vmem:[%s199 + $0x3c] sm:$0xf]
  %v232 = vunpack.c.l.b16 %v200
  %v233 = vunpack.c.l.b16 %v201
  %v234 = vunpack.c.l.b16 %v202
  %v235 = vunpack.c.l.b16 %v203
  %v236 = vunpack.c.l.b16 %v204
  %v237 = vunpack.c.l.b16 %v205
  %v238 = vunpack.c.l.b16 %v206
  %v239 = vunpack.c.l.b16 %v207
  %v240 = vunpack.c.l.b16 %v208
  %v241 = vunpack.c.l.b16 %v209
  %v242 = vunpack.c.l.b16 %v210
  %v243 = vunpack.c.l.b16 %v211
  %v244 = vunpack.c.l.b16 %v212
  %v245 = vunpack.c.l.b16 %v213
  %v246 = vunpack.c.l.b16 %v214
  %v247 = vunpack.c.l.b16 %v215
  %v248 = vpack.c.b16 %v233, %v232
  %v249 = vpack.c.b16 %v235, %v234
  %v250 = vpack.c.b16 %v237, %v236
  %v251 = vpack.c.b16 %v239, %v238
  %v252 = vpack.c.b16 %v241, %v240
  %v253 = vpack.c.b16 %v243, %v242
  %v254 = vpack.c.b16 %v245, %v244
  %v255 = vpack.c.b16 %v247, %v246
  %264 = vmatprep.subr.bf16.mxu0 0
  %265 = vmatpush1.bf16.msra.mxu0 %v248
  %266 = vmatprep.subr.bf16.mxu0 0
  %267 = vmatpush1.bf16.msra.mxu0 %v249
  %268 = vmatprep.subr.bf16.mxu0 0
  %269 = vmatpush1.bf16.msra.mxu0 %v250
  %270 = vmatprep.subr.bf16.mxu0 0
  %271 = vmatpush1.bf16.msra.mxu0 %v251
  %272 = vmatprep.subr.bf16.mxu0 0
  %273 = vmatpush1.bf16.msra.mxu0 %v252
  %274 = vmatprep.subr.bf16.mxu0 0
  %275 = vmatpush1.bf16.msra.mxu0 %v253
  %276 = vmatprep.subr.bf16.mxu0 0
  %277 = vmatpush1.bf16.msra.mxu0 %v254
  %278 = vmatprep.subr.bf16.mxu0 0
  %279 = vmatpush1.bf16.msra.mxu0 %v255
  %280 = vmatprep.subr.bf16.mxu0 0
  %281 = vmatpush1.bf16.msra.mxu0 0
  %282 = vmatprep.subr.bf16.mxu0 0
  %283 = vmatpush1.bf16.msra.mxu0 0
  %284 = vmatprep.subr.bf16.mxu0 0
  %285 = vmatpush1.bf16.msra.mxu0 0
  %286 = vmatprep.subr.bf16.mxu0 0
  %287 = vmatpush1.bf16.msra.mxu0 0
  %288 = vmatprep.subr.bf16.mxu0 0
  %289 = vmatpush1.bf16.msra.mxu0 0
  %290 = vmatprep.subr.bf16.mxu0 0
  %291 = vmatpush1.bf16.msra.mxu0 0
  %292 = vmatprep.subr.bf16.mxu0 0
  %293 = vmatpush1.bf16.msra.mxu0 0
  %294 = vmatprep.subr.bf16.mxu0 0
  %295 = vmatpush1.bf16.msra.mxu0 0
  %296 = vmatprep.mubr.bf16.mxu0 0
  %297 = vmatmul.mubr.bf16.gmra.mrb[0].mxu0 %v54
  %v298 = vpop.f32.mrb[0].mxu0
  %v299 = vadd.f32 0.0, %v298
  %v300 = vpop.f32.mrb[0].mxu0
  %v301 = vpop.f32.mrb[0].mxu0
  %v302 = vadd.f32 0.0, %v301
  %v303 = vpop.f32.mrb[0].mxu0
  %304 = vmatprep.mubr.bf16.mxu0 0
  %305 = vmatmul.mubr.bf16.gmra.mrb[0].mxu0 %v55
  %v306 = vpop.f32.mrb[0].mxu0
  %v307 = vadd.f32 0.0, %v306
  %v308 = vpop.f32.mrb[0].mxu0
  %v309 = vpop.f32.mrb[0].mxu0
  %v310 = vadd.f32 0.0, %v309
  %v311 = vpop.f32.mrb[0].mxu0
  %312 = vdwg.mxu0
  %v329 = vunpack.c.l.b16 %v183
  %v330 = vunpack.c.l.b16 %v184
  %v331 = vunpack.c.l.b16 %v185
  %v332 = vunpack.c.l.b16 %v186
  %v333 = vunpack.c.l.b16 %v187
  %v334 = vunpack.c.l.b16 %v188
  %v335 = vunpack.c.l.b16 %v189
  %v336 = vunpack.c.l.b16 %v190
  %v337 = vunpack.c.l.b16 %v191
  %v338 = vunpack.c.l.b16 %v192
  %v339 = vunpack.c.l.b16 %v193
  %v340 = vunpack.c.l.b16 %v194
  %v341 = vunpack.c.l.b16 %v195
  %v342 = vunpack.c.l.b16 %v196
  %v343 = vunpack.c.l.b16 %v197
  %v344 = vunpack.c.l.b16 %v198
  %v345 = vpack.c.b16 %v330, %v329
  %v346 = vpack.c.b16 %v332, %v331
  %v347 = vpack.c.b16 %v334, %v333
  %v348 = vpack.c.b16 %v336, %v335
  %v349 = vpack.c.b16 %v338, %v337
  %v350 = vpack.c.b16 %v340, %v339
  %v351 = vpack.c.b16 %v342, %v341
  %v352 = vpack.c.b16 %v344, %v343
  %361 = vmatprep.subr.bf16.mxu0 0
  %362 = vmatpush1.bf16.msra.mxu0 %v345
  %363 = vmatprep.subr.bf16.mxu0 0
  %364 = vmatpush1.bf16.msra.mxu0 %v346
  %365 = vmatprep.subr.bf16.mxu0 0
  %366 = vmatpush1.bf16.msra.mxu0 %v347
  %367 = vmatprep.subr.bf16.mxu0 0
  %368 = vmatpush1.bf16.msra.mxu0 %v348
  %369 = vmatprep.subr.bf16.mxu0 0
  %370 = vmatpush1.bf16.msra.mxu0 %v349
  %371 = vmatprep.subr.bf16.mxu0 0
  %372 = vmatpush1.bf16.msra.mxu0 %v350
  %373 = vmatprep.subr.bf16.mxu0 0
  %374 = vmatpush1.bf16.msra.mxu0 %v351
  %375 = vmatprep.subr.bf16.mxu0 0
  %376 = vmatpush1.bf16.msra.mxu0 %v352
  %377 = vmatprep.subr.bf16.mxu0 0
  %378 = vmatpush1.bf16.msra.mxu0 0
  %379 = vmatprep.subr.bf16.mxu0 0
  %380 = vmatpush1.bf16.msra.mxu0 0
  %381 = vmatprep.subr.bf16.mxu0 0
  %382 = vmatpush1.bf16.msra.mxu0 0
  %383 = vmatprep.subr.bf16.mxu0 0
  %384 = vmatpush1.bf16.msra.mxu0 0
  %385 = vmatprep.subr.bf16.mxu0 0
  %386 = vmatpush1.bf16.msra.mxu0 0
  %387 = vmatprep.subr.bf16.mxu0 0
  %388 = vmatpush1.bf16.msra.mxu0 0
  %389 = vmatprep.subr.bf16.mxu0 0
  %390 = vmatpush1.bf16.msra.mxu0 0
  %391 = vmatprep.subr.bf16.mxu0 0
  %392 = vmatpush1.bf16.msra.mxu0 0
  %393 = vmatprep.mubr.bf16.mxu0 0
  %394 = vmatmul.mubr.bf16.gmra.mrb[0].mxu0 %v114
  %v395 = vpop.f32.mrb[0].mxu0
  %v396 = vadd.f32 %v299, %v395
  %v397 = vpop.f32.mrb[0].mxu0
  %v398 = vpop.f32.mrb[0].mxu0
  %v399 = vadd.f32 %v302, %v398
  %v400 = vpop.f32.mrb[0].mxu0
  %401 = vmatprep.mubr.bf16.mxu0 0
  %402 = vmatmul.mubr.bf16.gmra.mrb[0].mxu0 %v115
  %v403 = vpop.f32.mrb[0].mxu0
  %v404 = vadd.f32 %v307, %v403
  %v405 = vpop.f32.mrb[0].mxu0
  %v406 = vpop.f32.mrb[0].mxu0
  %v407 = vadd.f32 %v310, %v406
  %v408 = vpop.f32.mrb[0].mxu0
  %409 = vdwg.mxu0
  %s410 = scalar_lea.vmem %s1, 128
  %v411 = vld [vmem:[%s410] sm:$0xf]
  %v412 = vld [vmem:[%s410 + $0x4] sm:$0xf]
  %v413 = vld [vmem:[%s410 + $0x8] sm:$0xf]
  %v414 = vld [vmem:[%s410 + $0xc] sm:$0xf]
  %v415 = vld [vmem:[%s410 + $0x10] sm:$0xf]
  %v416 = vld [vmem:[%s410 + $0x14] sm:$0xf]
  %v417 = vld [vmem:[%s410 + $0x18] sm:$0xf]
  %v418 = vld [vmem:[%s410 + $0x1c] sm:$0xf]
  %v419 = vld [vmem:[%s410 + $0x20] sm:$0xf]
  %v420 = vld [vmem:[%s410 + $0x24] sm:$0xf]
  %v421 = vld [vmem:[%s410 + $0x28] sm:$0xf]
  %v422 = vld [vmem:[%s410 + $0x2c] sm:$0xf]
  %v423 = vld [vmem:[%s410 + $0x30] sm:$0xf]
  %v424 = vld [vmem:[%s410 + $0x34] sm:$0xf]
  %v425 = vld [vmem:[%s410 + $0x38] sm:$0xf]
  %v426 = vld [vmem:[%s410 + $0x3c] sm:$0xf]
  %v443 = vunpack.c.l.b16 %v411
  %v444 = vunpack.c.l.b16 %v412
  %v445 = vunpack.c.l.b16 %v413
  %v446 = vunpack.c.l.b16 %v414
  %v447 = vunpack.c.l.b16 %v415
  %v448 = vunpack.c.l.b16 %v416
  %v449 = vunpack.c.l.b16 %v417
  %v450 = vunpack.c.l.b16 %v418
  %v451 = vunpack.c.l.b16 %v419
  %v452 = vunpack.c.l.b16 %v420
  %v453 = vunpack.c.l.b16 %v421
  %v454 = vunpack.c.l.b16 %v422
  %v455 = vunpack.c.l.b16 %v423
  %v456 = vunpack.c.l.b16 %v424
  %v457 = vunpack.c.l.b16 %v425
  %v458 = vunpack.c.l.b16 %v426
  %v459 = vpack.c.b16 %v444, %v443
  %v460 = vpack.c.b16 %v446, %v445
  %v461 = vpack.c.b16 %v448, %v447
  %v462 = vpack.c.b16 %v450, %v449
  %v463 = vpack.c.b16 %v452, %v451
  %v464 = vpack.c.b16 %v454, %v453
  %v465 = vpack.c.b16 %v456, %v455
  %v466 = vpack.c.b16 %v458, %v457
  %475 = vmatprep.subr.bf16.mxu0 0
  %476 = vmatpush1.bf16.msra.mxu0 %v459
  %477 = vmatprep.subr.bf16.mxu0 0
  %478 = vmatpush1.bf16.msra.mxu0 %v460
  %479 = vmatprep.subr.bf16.mxu0 0
  %480 = vmatpush1.bf16.msra.mxu0 %v461
  %481 = vmatprep.subr.bf16.mxu0 0
  %482 = vmatpush1.bf16.msra.mxu0 %v462
  %483 = vmatprep.subr.bf16.mxu0 0
  %484 = vmatpush1.bf16.msra.mxu0 %v463
  %485 = vmatprep.subr.bf16.mxu0 0
  %486 = vmatpush1.bf16.msra.mxu0 %v464
  %487 = vmatprep.subr.bf16.mxu0 0
  %488 = vmatpush1.bf16.msra.mxu0 %v465
  %489 = vmatprep.subr.bf16.mxu0 0
  %490 = vmatpush1.bf16.msra.mxu0 %v466
  %491 = vmatprep.subr.bf16.mxu0 0
  %492 = vmatpush1.bf16.msra.mxu0 0
  %493 = vmatprep.subr.bf16.mxu0 0
  %494 = vmatpush1.bf16.msra.mxu0 0
  %495 = vmatprep.subr.bf16.mxu0 0
  %496 = vmatpush1.bf16.msra.mxu0 0
  %497 = vmatprep.subr.bf16.mxu0 0
  %498 = vmatpush1.bf16.msra.mxu0 0
  %499 = vmatprep.subr.bf16.mxu0 0
  %500 = vmatpush1.bf16.msra.mxu0 0
  %501 = vmatprep.subr.bf16.mxu0 0
  %502 = vmatpush1.bf16.msra.mxu0 0
  %503 = vmatprep.subr.bf16.mxu0 0
  %504 = vmatpush1.bf16.msra.mxu0 0
  %505 = vmatprep.subr.bf16.mxu0 0
  %506 = vmatpush1.bf16.msra.mxu0 0
  %507 = vmatprep.mubr.bf16.mxu0 0
  %508 = vmatmul.mubr.bf16.gmra.mrb[0].mxu0 %v181
  %v509 = vpop.f32.mrb[0].mxu0
  %v510 = vadd.f32 0.0, %v509
  %v511 = vpop.f32.mrb[0].mxu0
  %v512 = vpop.f32.mrb[0].mxu0
  %v513 = vadd.f32 0.0, %v512
  %v514 = vpop.f32.mrb[0].mxu0
  %515 = vmatprep.mubr.bf16.mxu0 0
  %516 = vmatmul.mubr.bf16.gmra.mrb[0].mxu0 %v182
  %v517 = vpop.f32.mrb[0].mxu0
  %v518 = vadd.f32 0.0, %v517
  %v519 = vpop.f32.mrb[0].mxu0
  %v520 = vpop.f32.mrb[0].mxu0
  %v521 = vadd.f32 0.0, %v520
  %v522 = vpop.f32.mrb[0].mxu0
  %523 = vdwg.mxu0
  %v524 = vadd.f32 %v396, %v510
  %v525 = vadd.f32 %v399, %v513
  %v526 = vadd.f32 %v404, %v518
  %v527 = vadd.f32 %v407, %v521
  %v528 = vadd.f32 %v524, %v525
  %v529 = vadd.f32 %v528, %v526
  %v530 = vadd.f32 %v529, %v527
  %v531 = vrot.slane %v530, 4
  %v532 = vadd.f32 %v530, %v531
  %v533 = vrot.slane %v532, 2
  %v534 = vadd.f32 %v532, %v533
  %v535 = vrot.slane %v534, 1
  %v536 = vadd.f32 %v534, %v535
  %537 = vrot.lane.b32.xlu0 %v536, 8
  %v538 = vpop.permute.xlu0 %537
  %v539 = vadd.f32 %v536, %v538
  %540 = vrot.lane.b32.xlu0 %v539, 16
  %v541 = vpop.permute.xlu0 %540
  %v542 = vadd.f32 %v539, %v541
  %543 = vrot.lane.b32.xlu0 %v542, 32
  %v544 = vpop.permute.xlu0 %543
  %v545 = vadd.f32 %v542, %v544
  %546 = vrot.lane.b32.xlu0 %v545, 64
  %v547 = vpop.permute.xlu0 %546
  %v548 = vadd.f32 %v545, %v547
  %v549 = vmul.f32 %v524, %v524
  %v550 = vmul.f32 %v525, %v525
  %v551 = vmul.f32 %v526, %v526
  %v552 = vmul.f32 %v527, %v527
  %v553 = vadd.f32 %v549, %v550
  %v554 = vadd.f32 %v553, %v551
  %v555 = vadd.f32 %v554, %v552
  %v556 = vrot.slane %v555, 4
  %v557 = vadd.f32 %v555, %v556
  %v558 = vrot.slane %v557, 2
  %v559 = vadd.f32 %v557, %v558
  %v560 = vrot.slane %v559, 1
  %v561 = vadd.f32 %v559, %v560
  %562 = vrot.lane.b32.xlu0 %v561, 8
  %v563 = vpop.permute.xlu0 %562
  %v564 = vadd.f32 %v561, %v563
  %565 = vrot.lane.b32.xlu0 %v564, 16
  %v566 = vpop.permute.xlu0 %565
  %v567 = vadd.f32 %v564, %v566
  %568 = vrot.lane.b32.xlu0 %v567, 32
  %v569 = vpop.permute.xlu0 %568
  %v570 = vadd.f32 %v567, %v569
  %571 = vrot.lane.b32.xlu0 %v570, 64
  %v572 = vpop.permute.xlu0 %571
  %v573 = vadd.f32 %v570, %v572
  %v574 = vmul.f32 %v548, 0.001953125
  %v575 = vmul.f32 %v573, 0.001953125
  %v576 = vmul.f32 %v574, %v574
  %v577 = vsub.f32 %v575, %v576
  %v578 = vlaneseq
  %v579 = vshrl.u32 %v578, 7
  %v580 = vsub.s32 0, %v579
  %v581 = vrot.slane %v574, %v580
  %v582 = vsub.f32 %v524, %v581
  %v583 = vsub.f32 %v525, %v581
  %v584 = vsub.f32 %v526, %v581
  %v585 = vsub.f32 %v527, %v581
  %v586 = vadd.f32 %v577, 1e-05
  %v587 = vrsqrt.pop %v586
  %v588 = vmul.f32 %v587, %v18
  %v589 = vlaneseq
  %v590 = vshrl.u32 %v589, 7
  %v591 = vsub.s32 0, %v590
  %v592 = vrot.slane %v588, %v591
  %v593 = vmul.f32 %v582, %v592
  %v594 = vmul.f32 %v583, %v592
  %v595 = vmul.f32 %v584, %v592
  %v596 = vmul.f32 %v585, %v592
  %v597 = vlaneseq
  %v598 = vshrl.u32 %v597, 7
  %v599 = vsub.s32 1, %v598
  %v600 = vrot.slane %v18, %v599
  %v601 = vadd.f32 %v593, %v600
  %v602 = vadd.f32 %v594, %v600
  %v603 = vadd.f32 %v595, %v600
  %v604 = vadd.f32 %v596, %v600
  %v605 = vmax.f32 %v601, 0.0
  %v606 = vmax.f32 %v602, 0.0
  %v607 = vmax.f32 %v603, 0.0
  %v608 = vmax.f32 %v604, 0.0
  %v609 = vpack.c.bf16 %v606, %v605
  %v610 = vpack.c.bf16 %v608, %v607
  %611 = vmatprep.subr.bf16.mxu0 0
  %612 = vmatpush1.bf16.msra.mxu0 %v609
  %613 = vmatprep.subr.bf16.mxu0 0
  %614 = vmatpush1.bf16.msra.mxu0 %v610
  %615 = vmatprep.subr.bf16.mxu0 0
  %616 = vmatpush1.bf16.msra.mxu0 0
  %617 = vmatprep.subr.bf16.mxu0 0
  %618 = vmatpush1.bf16.msra.mxu0 0
  %619 = vmatprep.subr.bf16.mxu0 0
  %620 = vmatpush1.bf16.msra.mxu0 0
  %621 = vmatprep.subr.bf16.mxu0 0
  %622 = vmatpush1.bf16.msra.mxu0 0
  %623 = vmatprep.subr.bf16.mxu0 0
  %624 = vmatpush1.bf16.msra.mxu0 0
  %625 = vmatprep.subr.bf16.mxu0 0
  %626 = vmatpush1.bf16.msra.mxu0 0
  %627 = vmatprep.subr.bf16.mxu0 0
  %628 = vmatpush1.bf16.msra.mxu0 0
  %629 = vmatprep.subr.bf16.mxu0 0
  %630 = vmatpush1.bf16.msra.mxu0 0
  %631 = vmatprep.subr.bf16.mxu0 0
  %632 = vmatpush1.bf16.msra.mxu0 0
  %633 = vmatprep.subr.bf16.mxu0 0
  %634 = vmatpush1.bf16.msra.mxu0 0
  %635 = vmatprep.subr.bf16.mxu0 0
  %636 = vmatpush1.bf16.msra.mxu0 0
  %637 = vmatprep.subr.bf16.mxu0 0
  %638 = vmatpush1.bf16.msra.mxu0 0
  %639 = vmatprep.subr.bf16.mxu0 0
  %640 = vmatpush1.bf16.msra.mxu0 0
  %641 = vmatprep.subr.bf16.mxu0 0
  %642 = vmatpush1.bf16.msra.mxu0 0
  %643 = vmatprep.mubr.bf16.mxu0 0
  %644 = vmatmul.mubr.bf16.gmra.mrb[0].mxu0 %v60
  %v645 = vpop.f32.mrb[0].mxu0
  %v646 = vadd.f32 0.0, %v645
  %v647 = vpop.f32.mrb[0].mxu0
  %v648 = vpop.f32.mrb[0].mxu0
  %v649 = vadd.f32 0.0, %v648
  %v650 = vpop.f32.mrb[0].mxu0
  %651 = vmatprep.mubr.bf16.mxu0 0
  %652 = vmatmul.mubr.bf16.gmra.mrb[0].mxu0 %v63
  %v653 = vpop.f32.mrb[0].mxu0
  %v654 = vadd.f32 0.0, %v653
  %v655 = vpop.f32.mrb[0].mxu0
  %v656 = vpop.f32.mrb[0].mxu0
  %v657 = vadd.f32 0.0, %v656
  %v658 = vpop.f32.mrb[0].mxu0
  %659 = vdwg.mxu0
  %v660 = vpack.c.bf16 %v649, %v646
  %v661 = vpack.c.bf16 %v657, %v654
  %662 = vmatprep.subr.bf16.mxu0 0
  %663 = vmatpush1.bf16.msra.mxu0 %v609
  %664 = vmatprep.subr.bf16.mxu0 0
  %665 = vmatpush1.bf16.msra.mxu0 %v610
  %666 = vmatprep.subr.bf16.mxu0 0
  %667 = vmatpush1.bf16.msra.mxu0 0
  %668 = vmatprep.subr.bf16.mxu0 0
  %669 = vmatpush1.bf16.msra.mxu0 0
  %670 = vmatprep.subr.bf16.mxu0 0
  %671 = vmatpush1.bf16.msra.mxu0 0
  %672 = vmatprep.subr.bf16.mxu0 0
  %673 = vmatpush1.bf16.msra.mxu0 0
  %674 = vmatprep.subr.bf16.mxu0 0
  %675 = vmatpush1.bf16.msra.mxu0 0
  %676 = vmatprep.subr.bf16.mxu0 0
  %677 = vmatpush1.bf16.msra.mxu0 0
  %678 = vmatprep.subr.bf16.mxu0 0
  %679 = vmatpush1.bf16.msra.mxu0 0
  %680 = vmatprep.subr.bf16.mxu0 0
  %681 = vmatpush1.bf16.msra.mxu0 0
  %682 = vmatprep.subr.bf16.mxu0 0
  %683 = vmatpush1.bf16.msra.mxu0 0
  %684 = vmatprep.subr.bf16.mxu0 0
  %685 = vmatpush1.bf16.msra.mxu0 0
  %686 = vmatprep.subr.bf16.mxu0 0
  %687 = vmatpush1.bf16.msra.mxu0 0
  %688 = vmatprep.subr.bf16.mxu0 0
  %689 = vmatpush1.bf16.msra.mxu0 0
  %690 = vmatprep.subr.bf16.mxu0 0
  %691 = vmatpush1.bf16.msra.mxu0 0
  %692 = vmatprep.subr.bf16.mxu0 0
  %693 = vmatpush1.bf16.msra.mxu0 0
  %694 = vmatprep.mubr.bf16.mxu0 0
  %695 = vmatmul.mubr.bf16.gmra.mrb[0].mxu0 %v127
  %v696 = vpop.f32.mrb[0].mxu0
  %v697 = vadd.f32 0.0, %v696
  %v698 = vpop.f32.mrb[0].mxu0
  %v699 = vpop.f32.mrb[0].mxu0
  %v700 = vadd.f32 0.0, %v699
  %v701 = vpop.f32.mrb[0].mxu0
  %702 = vmatprep.mubr.bf16.mxu0 0
  %703 = vmatmul.mubr.bf16.gmra.mrb[0].mxu0 %v130
  %v704 = vpop.f32.mrb[0].mxu0
  %v705 = vadd.f32 0.0, %v704
  %v706 = vpop.f32.mrb[0].mxu0
  %v707 = vpop.f32.mrb[0].mxu0
  %v708 = vadd.f32 0.0, %v707
  %v709 = vpop.f32.mrb[0].mxu0
  %710 = vdwg.mxu0
  %v711 = vpack.c.bf16 %v700, %v697
  %v712 = vpack.c.bf16 %v708, %v705
  %s713 = scalar_lea.vmem %s1, 192
  %v714 = vld [vmem:[%s713] sm:$0xf]
  %v715 = vld [vmem:[%s713 + $0x4] sm:$0xf]
  %v716 = vld [vmem:[%s713 + $0x8] sm:$0xf]
  %v717 = vld [vmem:[%s713 + $0xc] sm:$0xf]
  %v718 = vld [vmem:[%s713 + $0x10] sm:$0xf]
  %v719 = vld [vmem:[%s713 + $0x14] sm:$0xf]
  %v720 = vld [vmem:[%s713 + $0x18] sm:$0xf]
  %v721 = vld [vmem:[%s713 + $0x1c] sm:$0xf]
  %v722 = vld [vmem:[%s713 + $0x20] sm:$0xf]
  %v723 = vld [vmem:[%s713 + $0x24] sm:$0xf]
  %v724 = vld [vmem:[%s713 + $0x28] sm:$0xf]
  %v725 = vld [vmem:[%s713 + $0x2c] sm:$0xf]
  %v726 = vld [vmem:[%s713 + $0x30] sm:$0xf]
  %v727 = vld [vmem:[%s713 + $0x34] sm:$0xf]
  %v728 = vld [vmem:[%s713 + $0x38] sm:$0xf]
  %v729 = vld [vmem:[%s713 + $0x3c] sm:$0xf]
  %s730 = scalar_lea.vmem %s1, 256
  %v731 = vld [vmem:[%s730] sm:$0xf]
  %v732 = vld [vmem:[%s730 + $0x4] sm:$0xf]
  %v733 = vld [vmem:[%s730 + $0x8] sm:$0xf]
  %v734 = vld [vmem:[%s730 + $0xc] sm:$0xf]
  %v735 = vld [vmem:[%s730 + $0x10] sm:$0xf]
  %v736 = vld [vmem:[%s730 + $0x14] sm:$0xf]
  %v737 = vld [vmem:[%s730 + $0x18] sm:$0xf]
  %v738 = vld [vmem:[%s730 + $0x1c] sm:$0xf]
  %v739 = vld [vmem:[%s730 + $0x20] sm:$0xf]
  %v740 = vld [vmem:[%s730 + $0x24] sm:$0xf]
  %v741 = vld [vmem:[%s730 + $0x28] sm:$0xf]
  %v742 = vld [vmem:[%s730 + $0x2c] sm:$0xf]
  %v743 = vld [vmem:[%s730 + $0x30] sm:$0xf]
  %v744 = vld [vmem:[%s730 + $0x34] sm:$0xf]
  %v745 = vld [vmem:[%s730 + $0x38] sm:$0xf]
  %v746 = vld [vmem:[%s730 + $0x3c] sm:$0xf]
  %v763 = vunpack.c.l.b16 %v731
  %v764 = vunpack.c.l.b16 %v732
  %v765 = vunpack.c.l.b16 %v733
  %v766 = vunpack.c.l.b16 %v734
  %v767 = vunpack.c.l.b16 %v735
  %v768 = vunpack.c.l.b16 %v736
  %v769 = vunpack.c.l.b16 %v737
  %v770 = vunpack.c.l.b16 %v738
  %v771 = vunpack.c.l.b16 %v739
  %v772 = vunpack.c.l.b16 %v740
  %v773 = vunpack.c.l.b16 %v741
  %v774 = vunpack.c.l.b16 %v742
  %v775 = vunpack.c.l.b16 %v743
  %v776 = vunpack.c.l.b16 %v744
  %v777 = vunpack.c.l.b16 %v745
  %v778 = vunpack.c.l.b16 %v746
  %v779 = vpack.c.b16 %v764, %v763
  %v780 = vpack.c.b16 %v766, %v765
  %v781 = vpack.c.b16 %v768, %v767
  %v782 = vpack.c.b16 %v770, %v769
  %v783 = vpack.c.b16 %v772, %v771
  %v784 = vpack.c.b16 %v774, %v773
  %v785 = vpack.c.b16 %v776, %v775
  %v786 = vpack.c.b16 %v778, %v777
  %795 = vmatprep.subr.bf16.mxu0 0
  %796 = vmatpush1.bf16.msra.mxu0 %v779
  %797 = vmatprep.subr.bf16.mxu0 0
  %798 = vmatpush1.bf16.msra.mxu0 %v780
  %799 = vmatprep.subr.bf16.mxu0 0
  %800 = vmatpush1.bf16.msra.mxu0 %v781
  %801 = vmatprep.subr.bf16.mxu0 0
  %802 = vmatpush1.bf16.msra.mxu0 %v782
  %803 = vmatprep.subr.bf16.mxu0 0
  %804 = vmatpush1.bf16.msra.mxu0 %v783
  %805 = vmatprep.subr.bf16.mxu0 0
  %806 = vmatpush1.bf16.msra.mxu0 %v784
  %807 = vmatprep.subr.bf16.mxu0 0
  %808 = vmatpush1.bf16.msra.mxu0 %v785
  %809 = vmatprep.subr.bf16.mxu0 0
  %810 = vmatpush1.bf16.msra.mxu0 %v786
  %811 = vmatprep.subr.bf16.mxu0 0
  %812 = vmatpush1.bf16.msra.mxu0 0
  %813 = vmatprep.subr.bf16.mxu0 0
  %814 = vmatpush1.bf16.msra.mxu0 0
  %815 = vmatprep.subr.bf16.mxu0 0
  %816 = vmatpush1.bf16.msra.mxu0 0
  %817 = vmatprep.subr.bf16.mxu0 0
  %818 = vmatpush1.bf16.msra.mxu0 0
  %819 = vmatprep.subr.bf16.mxu0 0
  %820 = vmatpush1.bf16.msra.mxu0 0
  %821 = vmatprep.subr.bf16.mxu0 0
  %822 = vmatpush1.bf16.msra.mxu0 0
  %823 = vmatprep.subr.bf16.mxu0 0
  %824 = vmatpush1.bf16.msra.mxu0 0
  %825 = vmatprep.subr.bf16.mxu0 0
  %826 = vmatpush1.bf16.msra.mxu0 0
  %827 = vmatprep.mubr.bf16.mxu0 0
  %828 = vmatmul.mubr.bf16.gmra.mrb[0].mxu0 %v609
  %v829 = vpop.f32.mrb[0].mxu0
  %v830 = vadd.f32 0.0, %v829
  %v831 = vpop.f32.mrb[0].mxu0
  %v832 = vpop.f32.mrb[0].mxu0
  %v833 = vadd.f32 0.0, %v832
  %v834 = vpop.f32.mrb[0].mxu0
  %835 = vmatprep.mubr.bf16.mxu0 0
  %836 = vmatmul.mubr.bf16.gmra.mrb[0].mxu0 %v610
  %v837 = vpop.f32.mrb[0].mxu0
  %v838 = vadd.f32 0.0, %v837
  %v839 = vpop.f32.mrb[0].mxu0
  %v840 = vpop.f32.mrb[0].mxu0
  %v841 = vadd.f32 0.0, %v840
  %v842 = vpop.f32.mrb[0].mxu0
  %843 = vdwg.mxu0
  %v860 = vunpack.c.l.b16 %v714
  %v861 = vunpack.c.l.b16 %v715
  %v862 = vunpack.c.l.b16 %v716
  %v863 = vunpack.c.l.b16 %v717
  %v864 = vunpack.c.l.b16 %v718
  %v865 = vunpack.c.l.b16 %v719
  %v866 = vunpack.c.l.b16 %v720
  %v867 = vunpack.c.l.b16 %v721
  %v868 = vunpack.c.l.b16 %v722
  %v869 = vunpack.c.l.b16 %v723
  %v870 = vunpack.c.l.b16 %v724
  %v871 = vunpack.c.l.b16 %v725
  %v872 = vunpack.c.l.b16 %v726
  %v873 = vunpack.c.l.b16 %v727
  %v874 = vunpack.c.l.b16 %v728
  %v875 = vunpack.c.l.b16 %v729
  %v876 = vpack.c.b16 %v861, %v860
  %v877 = vpack.c.b16 %v863, %v862
  %v878 = vpack.c.b16 %v865, %v864
  %v879 = vpack.c.b16 %v867, %v866
  %v880 = vpack.c.b16 %v869, %v868
  %v881 = vpack.c.b16 %v871, %v870
  %v882 = vpack.c.b16 %v873, %v872
  %v883 = vpack.c.b16 %v875, %v874
  %892 = vmatprep.subr.bf16.mxu0 0
  %893 = vmatpush1.bf16.msra.mxu0 %v876
  %894 = vmatprep.subr.bf16.mxu0 0
  %895 = vmatpush1.bf16.msra.mxu0 %v877
  %896 = vmatprep.subr.bf16.mxu0 0
  %897 = vmatpush1.bf16.msra.mxu0 %v878
  %898 = vmatprep.subr.bf16.mxu0 0
  %899 = vmatpush1.bf16.msra.mxu0 %v879
  %900 = vmatprep.subr.bf16.mxu0 0
  %901 = vmatpush1.bf16.msra.mxu0 %v880
  %902 = vmatprep.subr.bf16.mxu0 0
  %903 = vmatpush1.bf16.msra.mxu0 %v881
  %904 = vmatprep.subr.bf16.mxu0 0
  %905 = vmatpush1.bf16.msra.mxu0 %v882
  %906 = vmatprep.subr.bf16.mxu0 0
  %907 = vmatpush1.bf16.msra.mxu0 %v883
  %908 = vmatprep.subr.bf16.mxu0 0
  %909 = vmatpush1.bf16.msra.mxu0 0
  %910 = vmatprep.subr.bf16.mxu0 0
  %911 = vmatpush1.bf16.msra.mxu0 0
  %912 = vmatprep.subr.bf16.mxu0 0
  %913 = vmatpush1.bf16.msra.mxu0 0
  %914 = vmatprep.subr.bf16.mxu0 0
  %915 = vmatpush1.bf16.msra.mxu0 0
  %916 = vmatprep.subr.bf16.mxu0 0
  %917 = vmatpush1.bf16.msra.mxu0 0
  %918 = vmatprep.subr.bf16.mxu0 0
  %919 = vmatpush1.bf16.msra.mxu0 0
  %920 = vmatprep.subr.bf16.mxu0 0
  %921 = vmatpush1.bf16.msra.mxu0 0
  %922 = vmatprep.subr.bf16.mxu0 0
  %923 = vmatpush1.bf16.msra.mxu0 0
  %924 = vmatprep.mubr.bf16.mxu0 0
  %925 = vmatmul.mubr.bf16.gmra.mrb[0].mxu0 %v660
  %v926 = vpop.f32.mrb[0].mxu0
  %v927 = vadd.f32 %v830, %v926
  %v928 = vpop.f32.mrb[0].mxu0
  %v929 = vpop.f32.mrb[0].mxu0
  %v930 = vadd.f32 %v833, %v929
  %v931 = vpop.f32.mrb[0].mxu0
  %932 = vmatprep.mubr.bf16.mxu0 0
  %933 = vmatmul.mubr.bf16.gmra.mrb[0].mxu0 %v661
  %v934 = vpop.f32.mrb[0].mxu0
  %v935 = vadd.f32 %v838, %v934
  %v936 = vpop.f32.mrb[0].mxu0
  %v937 = vpop.f32.mrb[0].mxu0
  %v938 = vadd.f32 %v841, %v937
  %v939 = vpop.f32.mrb[0].mxu0
  %940 = vdwg.mxu0
  %s941 = scalar_lea.vmem %s1, 320
  %v942 = vld [vmem:[%s941] sm:$0xf]
  %v943 = vld [vmem:[%s941 + $0x4] sm:$0xf]
  %v944 = vld [vmem:[%s941 + $0x8] sm:$0xf]
  %v945 = vld [vmem:[%s941 + $0xc] sm:$0xf]
  %v946 = vld [vmem:[%s941 + $0x10] sm:$0xf]
  %v947 = vld [vmem:[%s941 + $0x14] sm:$0xf]
  %v948 = vld [vmem:[%s941 + $0x18] sm:$0xf]
  %v949 = vld [vmem:[%s941 + $0x1c] sm:$0xf]
  %v950 = vld [vmem:[%s941 + $0x20] sm:$0xf]
  %v951 = vld [vmem:[%s941 + $0x24] sm:$0xf]
  %v952 = vld [vmem:[%s941 + $0x28] sm:$0xf]
  %v953 = vld [vmem:[%s941 + $0x2c] sm:$0xf]
  %v954 = vld [vmem:[%s941 + $0x30] sm:$0xf]
  %v955 = vld [vmem:[%s941 + $0x34] sm:$0xf]
  %v956 = vld [vmem:[%s941 + $0x38] sm:$0xf]
  %v957 = vld [vmem:[%s941 + $0x3c] sm:$0xf]
  %v974 = vunpack.c.l.b16 %v942
  %v975 = vunpack.c.l.b16 %v943
  %v976 = vunpack.c.l.b16 %v944
  %v977 = vunpack.c.l.b16 %v945
  %v978 = vunpack.c.l.b16 %v946
  %v979 = vunpack.c.l.b16 %v947
  %v980 = vunpack.c.l.b16 %v948
  %v981 = vunpack.c.l.b16 %v949
  %v982 = vunpack.c.l.b16 %v950
  %v983 = vunpack.c.l.b16 %v951
  %v984 = vunpack.c.l.b16 %v952
  %v985 = vunpack.c.l.b16 %v953
  %v986 = vunpack.c.l.b16 %v954
  %v987 = vunpack.c.l.b16 %v955
  %v988 = vunpack.c.l.b16 %v956
  %v989 = vunpack.c.l.b16 %v957
  %v990 = vpack.c.b16 %v975, %v974
  %v991 = vpack.c.b16 %v977, %v976
  %v992 = vpack.c.b16 %v979, %v978
  %v993 = vpack.c.b16 %v981, %v980
  %v994 = vpack.c.b16 %v983, %v982
  %v995 = vpack.c.b16 %v985, %v984
  %v996 = vpack.c.b16 %v987, %v986
  %v997 = vpack.c.b16 %v989, %v988
  %1006 = vmatprep.subr.bf16.mxu0 0
  %1007 = vmatpush1.bf16.msra.mxu0 %v990
  %1008 = vmatprep.subr.bf16.mxu0 0
  %1009 = vmatpush1.bf16.msra.mxu0 %v991
  %1010 = vmatprep.subr.bf16.mxu0 0
  %1011 = vmatpush1.bf16.msra.mxu0 %v992
  %1012 = vmatprep.subr.bf16.mxu0 0
  %1013 = vmatpush1.bf16.msra.mxu0 %v993
  %1014 = vmatprep.subr.bf16.mxu0 0
  %1015 = vmatpush1.bf16.msra.mxu0 %v994
  %1016 = vmatprep.subr.bf16.mxu0 0
  %1017 = vmatpush1.bf16.msra.mxu0 %v995
  %1018 = vmatprep.subr.bf16.mxu0 0
  %1019 = vmatpush1.bf16.msra.mxu0 %v996
  %1020 = vmatprep.subr.bf16.mxu0 0
  %1021 = vmatpush1.bf16.msra.mxu0 %v997
  %1022 = vmatprep.subr.bf16.mxu0 0
  %1023 = vmatpush1.bf16.msra.mxu0 0
  %1024 = vmatprep.subr.bf16.mxu0 0
  %1025 = vmatpush1.bf16.msra.mxu0 0
  %1026 = vmatprep.subr.bf16.mxu0 0
  %1027 = vmatpush1.bf16.msra.mxu0 0
  %1028 = vmatprep.subr.bf16.mxu0 0
  %1029 = vmatpush1.bf16.msra.mxu0 0
  %1030 = vmatprep.subr.bf16.mxu0 0
  %1031 = vmatpush1.bf16.msra.mxu0 0
  %1032 = vmatprep.subr.bf16.mxu0 0
  %1033 = vmatpush1.bf16.msra.mxu0 0
  %1034 = vmatprep.subr.bf16.mxu0 0
  %1035 = vmatpush1.bf16.msra.mxu0 0
  %1036 = vmatprep.subr.bf16.mxu0 0
  %1037 = vmatpush1.bf16.msra.mxu0 0
  %1038 = vmatprep.mubr.bf16.mxu0 0
  %1039 = vmatmul.mubr.bf16.gmra.mrb[0].mxu0 %v711
  %v1040 = vpop.f32.mrb[0].mxu0
  %v1041 = vadd.f32 0.0, %v1040
  %v1042 = vpop.f32.mrb[0].mxu0
  %v1043 = vpop.f32.mrb[0].mxu0
  %v1044 = vadd.f32 0.0, %v1043
  %v1045 = vpop.f32.mrb[0].mxu0
  %1046 = vmatprep.mubr.bf16.mxu0 0
  %1047 = vmatmul.mubr.bf16.gmra.mrb[0].mxu0 %v712
  %v1048 = vpop.f32.mrb[0].mxu0
  %v1049 = vadd.f32 0.0, %v1048
  %v1050 = vpop.f32.mrb[0].mxu0
  %v1051 = vpop.f32.mrb[0].mxu0
  %v1052 = vadd.f32 0.0, %v1051
  %v1053 = vpop.f32.mrb[0].mxu0
  %1054 = vdwg.mxu0
  %v1055 = vadd.f32 %v927, %v1041
  %v1056 = vadd.f32 %v930, %v1044
  %v1057 = vadd.f32 %v935, %v1049
  %v1058 = vadd.f32 %v938, %v1052
  %v1059 = vadd.f32 %v1055, %v1056
  %v1060 = vadd.f32 %v1059, %v1057
  %v1061 = vadd.f32 %v1060, %v1058
  %v1062 = vrot.slane %v1061, 4
  %v1063 = vadd.f32 %v1061, %v1062
  %v1064 = vrot.slane %v1063, 2
  %v1065 = vadd.f32 %v1063, %v1064
  %v1066 = vrot.slane %v1065, 1
  %v1067 = vadd.f32 %v1065, %v1066
  %1068 = vrot.lane.b32.xlu0 %v1067, 8
  %v1069 = vpop.permute.xlu0 %1068
  %v1070 = vadd.f32 %v1067, %v1069
  %1071 = vrot.lane.b32.xlu0 %v1070, 16
  %v1072 = vpop.permute.xlu0 %1071
  %v1073 = vadd.f32 %v1070, %v1072
  %1074 = vrot.lane.b32.xlu0 %v1073, 32
  %v1075 = vpop.permute.xlu0 %1074
  %v1076 = vadd.f32 %v1073, %v1075
  %1077 = vrot.lane.b32.xlu0 %v1076, 64
  %v1078 = vpop.permute.xlu0 %1077
  %v1079 = vadd.f32 %v1076, %v1078
  %v1080 = vmul.f32 %v1055, %v1055
  %v1081 = vmul.f32 %v1056, %v1056
  %v1082 = vmul.f32 %v1057, %v1057
  %v1083 = vmul.f32 %v1058, %v1058
  %v1084 = vadd.f32 %v1080, %v1081
  %v1085 = vadd.f32 %v1084, %v1082
  %v1086 = vadd.f32 %v1085, %v1083
  %v1087 = vrot.slane %v1086, 4
  %v1088 = vadd.f32 %v1086, %v1087
  %v1089 = vrot.slane %v1088, 2
  %v1090 = vadd.f32 %v1088, %v1089
  %v1091 = vrot.slane %v1090, 1
  %v1092 = vadd.f32 %v1090, %v1091
  %1093 = vrot.lane.b32.xlu0 %v1092, 8
  %v1094 = vpop.permute.xlu0 %1093
  %v1095 = vadd.f32 %v1092, %v1094
  %1096 = vrot.lane.b32.xlu0 %v1095, 16
  %v1097 = vpop.permute.xlu0 %1096
  %v1098 = vadd.f32 %v1095, %v1097
  %1099 = vrot.lane.b32.xlu0 %v1098, 32
  %v1100 = vpop.permute.xlu0 %1099
  %v1101 = vadd.f32 %v1098, %v1100
  %1102 = vrot.lane.b32.xlu0 %v1101, 64
  %v1103 = vpop.permute.xlu0 %1102
  %v1104 = vadd.f32 %v1101, %v1103
  %v1105 = vmul.f32 %v1079, 0.001953125
  %v1106 = vmul.f32 %v1104, 0.001953125
  %v1107 = vmul.f32 %v1105, %v1105
  %v1108 = vsub.f32 %v1106, %v1107
  %v1109 = vlaneseq
  %v1110 = vshrl.u32 %v1109, 7
  %v1111 = vsub.s32 0, %v1110
  %v1112 = vrot.slane %v1105, %v1111
  %v1113 = vsub.f32 %v1055, %v1112
  %v1114 = vsub.f32 %v1056, %v1112
  %v1115 = vsub.f32 %v1057, %v1112
  %v1116 = vsub.f32 %v1058, %v1112
  %v1117 = vadd.f32 %v1108, 1e-05
  %v1118 = vrsqrt.pop %v1117
  %v1120 = vrot.slane %v18, 2
  %v1122 = vmul.f32 %v1118, %v1120
  %v1123 = vlaneseq
  %v1124 = vshrl.u32 %v1123, 7
  %v1125 = vsub.s32 0, %v1124
  %v1126 = vrot.slane %v1122, %v1125
  %v1127 = vmul.f32 %v1113, %v1126
  %v1128 = vmul.f32 %v1114, %v1126
  %v1129 = vmul.f32 %v1115, %v1126
  %v1130 = vmul.f32 %v1116, %v1126
  %v1131 = vlaneseq
  %v1132 = vshrl.u32 %v1131, 7
  %v1133 = vsub.s32 3, %v1132
  %v1134 = vrot.slane %v18, %v1133
  %v1135 = vadd.f32 %v1127, %v1134
  %v1136 = vadd.f32 %v1128, %v1134
  %v1137 = vadd.f32 %v1129, %v1134
  %v1138 = vadd.f32 %v1130, %v1134
  %1139 = vst [vmem:[%s4] sm:$0xff] %v1135
  %1140 = vst [vmem:[%s4 + $0x8] sm:$0xff] %v1136
  %1141 = vst [vmem:[%s4 + $0x10] sm:$0xff] %v1137
  %1142 = vst [vmem:[%s4 + $0x18] sm:$0xff] %v1138
  // Predicated region
  $region18: #{cell2_forward.1} parent=0 // pred_check
    _
  $region19: #{cell2_forward.1} parent=0 // pred_check_branch
    %1144 = sbr.rel (0) target = $region21
  $region20: #{cell2_forward.1} parent=0 // pred_region
    _
  $region21: #{cell2_forward.1} parent=0 // pred_fallthru
    _
  // Predicated region
  $region22: #{cell2_forward.1} parent=0 // pred_check
    _
  $region23: #{cell2_forward.1} parent=0 // pred_check_branch
    %1146 = sbr.rel (0) target = $region25
  $region24: #{cell2_forward.1} parent=0 // pred_region
    _
  $region25: #{cell2_forward.1} parent=0 // pred_fallthru
    _

</llo_original>
